<compile_context>
chip_gen: v5e
topology: v5e:2x2
jax: 0.10.0
libtpu: 0.0.40
codegen_flags: <defaults>
</compile_context>

<pallas_src>
import jax
import jax.numpy as jnp
from jax.experimental import pallas as pl
from jax.experimental.pallas import tpu as pltpu


def _round_up(x, m):
    return (x + m - 1) // m * m


def _cdiv(a, b):
    return -(-a // b)


def _cond_kernel(scalars_ref,            # SMEM (2,): [b2, scaling_factor]
                 d_ref, si_ref, sj_ref,  # VMEM (TB, L*D) seq dtype (bf16/f32)
                 mi_ref, mj_ref,         # VMEM (TB, L) float32
                 w1t_ref,                # VMEM (D, D*D)   == Linear(D, D^2).weight.T
                 b1_ref,                 # VMEM (1, D*D)
                 kab_ref,                # VMEM (D*D, 2D)  == [kron(I,w2a) | kron(I,w2b)]
                 t2_ref,                 # VMEM (2D, 2*L*D) tile-across-L matrix
                 e_ref,                  # VMEM (L, L*D)   mask lane-expansion matrix
                 out_ref):               # VMEM (1, 1, TB)
    f32 = jnp.float32
    tb, ld = d_ref.shape
    dd = w1t_ref.shape[0]                # D
    b2 = scalars_ref[0]
    sf = scalars_ref[1]

    d = d_ref[...]                                   # (TB, L*D), lane-dense
    # dm = d[:, 0, :]  -> first D lanes of the flattened layout.
    dm = d[:, :dd].astype(f32)                       # (TB, D)

    # M_b = relu(dm_b @ W1^T + b1), kept flat as (TB, D*D) -- never reshaped.
    m_flat = jnp.dot(dm, w1t_ref[...], preferred_element_type=f32)
    m_flat = jnp.maximum(m_flat + b1_ref[...], 0.0)  # (TB, D*D)

    # va = M @ w2a, vb = M @ w2b in ONE fused matmul via kron weights,
    # then tiled across the L lane groups with a tiny constant matmul.
    vab = jnp.dot(m_flat, kab_ref[...], preferred_element_type=f32)    # (TB, 2D)
    vab_t = jnp.dot(vab, t2_ref[...], preferred_element_type=f32)      # (TB, 2*L*D)
    va_t = vab_t[:, :ld]                                               # (TB, L*D)
    vb_t = vab_t[:, ld:]

    # Expand masks to the flat (L*D) lane layout via a tiny matmul (idle MXU).
    mi = mi_ref[...]
    mj = mj_ref[...]
    mi_e = jnp.dot(mi, e_ref[...], preferred_element_type=f32)         # (TB, L*D)
    mj_e = jnp.dot(mj, e_ref[...], preferred_element_type=f32)
    dmask_e = mi_e - mj_e

    # score1 - score2 (without b2) =
    #   sum_{l,k} [(mi-mj)*d*va + mi*si*vb - mj*sj*vb]
    t = (dmask_e * (d * va_t)
         + mi_e * (si_ref[...] * vb_t)
         - mj_e * (sj_ref[...] * vb_t))                                # (TB, L*D)

    ones = jnp.ones((1, ld), f32)
    red = jax.lax.dot_general(ones, t, (((1,), (1,)), ((), ())),
                              preferred_element_type=f32)              # (1, TB)
    # b2 contribution folded onto the (1, TB) result:
    # sum_flat(dmask_e) == D * sum_l (mi - mj), so b2*rowsum = (b2/D)*msum.
    msum = jax.lax.dot_general(ones, dmask_e, (((1,), (1,)), ((), ())),
                               preferred_element_type=f32)             # (1, TB)
    diff = red + (b2 * (1.0 / dd)) * msum
    x = sf * diff

    # Numerically safe sigmoid (no inf intermediates for large |x|).
    pos = x >= 0.0
    ex = jnp.exp(jnp.where(pos, -x, x))
    sig = jnp.where(pos, 1.0 / (1.0 + ex), ex / (1.0 + ex))
    out_ref[...] = sig.reshape(1, 1, tb)


def cond_nnw_avg_pr_forward(d, si, sj, mi, mj, W1, b1, W2, b2, scaling_factor,
                            *, block_b=1024, seq_dtype=jnp.bfloat16):
    B, L, D = d.shape
    H = 2 * D
    LD = L * D
    assert W1.shape == (D * D, D) and W2.shape == (1, H)
    f32 = jnp.float32

    # ----- resident weight footprint & buffering policy -------------------
    weight_bytes = 4 * (D * D * D + D * D + D * D * 2 * D + 2 * D * 2 * LD + L * LD)
    single_buffer_weights = weight_bytes > (4 << 20)   # only matters for big D
    resident_bytes = weight_bytes if single_buffer_weights else 2 * weight_bytes

    # ----- batch tile selection -------------------------------------------
    # (a) multiple of 8 sublanes, (b) >=2 grid steps when B allows it (so both
    # v7x TensorCores get work), (c) streaming + intermediate VMEM within a
    # budget that fits every generation (v7x has only 64 MiB physical VMEM).
    vmem_limit = 64 << 20
    itemsize = jnp.dtype(seq_dtype).itemsize
    stream_per_row = 2 * (3 * LD * itemsize + 2 * L * 4)      # double-buffered I/O
    interm_per_row = 4 * (D * D + 12 * LD + 4 * D)            # f32 in-kernel temps
    budget = max(1 << 20, vmem_limit - resident_bytes - (4 << 20))
    tb_budget = max(8, (budget // (stream_per_row + interm_per_row)) // 8 * 8)
    tb_two_steps = _round_up(_cdiv(B, 2), 8)                  # >=2 grid steps
    TB = max(8, min(block_b, tb_two_steps, tb_budget))
    B_pad = _round_up(B, TB)
    nb = B_pad // TB

    def pad_b(x):
        pad = B_pad - B
        if pad == 0:
            return x
        return jnp.pad(x, ((0, pad),) + ((0, 0),) * (x.ndim - 1))

    # Flatten (L, D) into one lane-dense last dim; cast the streamed sequence
    # data (the HBM-bandwidth-dominant traffic) to bf16 by default.
    d_p = pad_b(d.reshape(B, LD).astype(seq_dtype))
    si_p = pad_b(si.reshape(B, LD).astype(seq_dtype))
    sj_p = pad_b(sj.reshape(B, LD).astype(seq_dtype))
    mi_p = pad_b(mi.astype(f32).reshape(B, L))
    mj_p = pad_b(mj.astype(f32).reshape(B, L))

    w1t = W1.T.astype(f32)                                    # (D, D*D)
    b1r = b1.reshape(1, D * D).astype(f32)

    w2 = W2.reshape(H).astype(f32)
    eye = jnp.eye(D, dtype=f32)
    ka = jnp.kron(eye, w2[:D].reshape(D, 1))                  # (D*D, D): m_flat@ka == M@w2a
    kb = jnp.kron(eye, w2[D:].reshape(D, 1))                  # (D*D, D)
    kab = jnp.concatenate([ka, kb], axis=1)                   # (D*D, 2D) fused weight
    t2 = jnp.kron(jnp.eye(2, dtype=f32), jnp.tile(eye, (1, L)))    # (2D, 2*L*D)
    e = jnp.kron(jnp.eye(L, dtype=f32), jnp.ones((1, D), f32))     # (L, L*D)

    scalars = jnp.stack([jnp.asarray(b2, f32).reshape(()),
                         jnp.asarray(scaling_factor, f32).reshape(())])

    def w_spec(shape):
        zero = (0,) * len(shape)
        if single_buffer_weights:
            # Constant index_map -> single-buffer the resident weights (v7x VMEM).
            return pl.BlockSpec(shape, lambda b, s: zero, pipeline_mode=pl.Buffered(1))
        return pl.BlockSpec(shape, lambda b, s: zero)

    # TODO(synk): sweep pipeline_mode=pl.Buffered(3) on seq_spec if xprof still
    # shows exposed DMA after the larger-TB/bf16 changes.
    seq_spec = pl.BlockSpec((TB, LD), lambda b, s: (b, 0))
    msk_spec = pl.BlockSpec((TB, L), lambda b, s: (b, 0))

    out = pl.pallas_call(
        _cond_kernel,
        out_shape=jax.ShapeDtypeStruct((nb, 1, TB), f32),
        grid_spec=pltpu.PrefetchScalarGridSpec(
            num_scalar_prefetch=1,
            grid=(nb,),
            in_specs=[
                seq_spec, seq_spec, seq_spec,            # d, si, sj (flat)
                msk_spec, msk_spec,                      # mi, mj
                w_spec((D, D * D)),                      # W1^T
                w_spec((1, D * D)),                      # b1
                w_spec((D * D, 2 * D)),                  # fused kron weight
                w_spec((2 * D, 2 * LD)),                 # tile-across-L matrix
                w_spec((L, LD)),                         # mask expansion matrix
            ],
            out_specs=pl.BlockSpec((1, 1, TB), lambda b, s: (b, 0, 0)),
        ),
        compiler_params=pltpu.CompilerParams(
            dimension_semantics=("parallel",),           # megacore on v7x
            vmem_limit_bytes=vmem_limit,
        ),
    )(scalars, d_p, si_p, sj_p, mi_p, mj_p, w1t, b1r, kab, t2, e)

    return out.reshape(B_pad)[:B]


def reference_forward(d, si, sj, mi, mj, W1, b1, W2, b2, scaling_factor):
    B, L, D = d.shape
    dm = d[:, 0, :]
    M = jax.nn.relu(dm @ W1.T + b1).reshape(B, D, D)

    def predict(s, mask):
        xd = jnp.einsum('bld,bde->ble', d, M)
        xs = jnp.einsum('bld,bde->ble', s, M)
        x = jnp.concatenate([xd, xs], axis=2)            # (B, L, 2D)
        z = (x @ W2.T + b2)[..., 0]                      # (B, L)
        return jnp.sum(z * mask.astype(z.dtype), axis=1)

    s1 = predict(si, mi)
    s2 = predict(sj, mj)
    return jax.nn.sigmoid(scaling_factor * (s1 - s2))


if __name__ == "__main__":
    B, L, D = 2, 8, 8
    H = 2 * D                 # Linear(H, 1) consumes concat of two D-dim transforms
    scaling_factor = 0.5

    key = jax.random.PRNGKey(0)
    k = jax.random.split(key, 9)

    d = jax.random.normal(k[0], (B, L, D), dtype=jnp.float32)
    si = jax.random.normal(k[1], (B, L, D), dtype=jnp.float32)
    sj = jax.random.normal(k[2], (B, L, D), dtype=jnp.float32)
    mi = jax.random.bernoulli(k[3], 0.6, (B, L))
    mj = jax.random.bernoulli(k[4], 0.6, (B, L))

    # Parameter shapes from AvgModel / CondNNWAvgPRModel __init__.
    W1 = 0.1 * jax.random.normal(k[5], (D * D, D), dtype=jnp.float32)   # Linear(D, D^2).weight
    b1 = 0.1 * jax.random.normal(k[6], (D * D,), dtype=jnp.float32)     # Linear(D, D^2).bias
    W2 = 0.1 * jax.random.normal(k[7], (1, H), dtype=jnp.float32)       # Linear(H, 1).weight
    b2 = 0.1 * jax.random.normal(k[8], (1,), dtype=jnp.float32)         # Linear(H, 1).bias

    ref = jax.block_until_ready(
        reference_forward(d, si, sj, mi, mj, W1, b1, W2, b2, scaling_factor))

    # Exact path (f32 streaming inputs): tight tolerance against the reference.
    out_f32 = jax.block_until_ready(
        cond_nnw_avg_pr_forward(d, si, sj, mi, mj, W1, b1, W2, b2,
                                scaling_factor, seq_dtype=jnp.float32))
    assert out_f32.shape == (B,)
    assert jnp.allclose(out_f32, ref, rtol=1e-4, atol=1e-5), (out_f32, ref)

    # Default fast path (bf16 streaming inputs): bf16-appropriate tolerance.
    out = jax.block_until_ready(
        cond_nnw_avg_pr_forward(d, si, sj, mi, mj, W1, b1, W2, b2, scaling_factor))
    assert out.shape == (B,)
    assert jnp.allclose(out, ref, rtol=2e-2, atol=2e-3), (out, ref)

    print("KERNEL_OK")
</pallas_src>

<mosaic_0001>
module attributes {stable_mosaic.version = 11 : i64} {
  func.func @_cond_kernel(%arg0: i32, %arg1: memref<2xf32, #tpu.memory_space<smem>>, %arg2: memref<8x64xf32, #tpu.memory_space<vmem>>, %arg3: memref<8x64xf32, #tpu.memory_space<vmem>>, %arg4: memref<8x64xf32, #tpu.memory_space<vmem>>, %arg5: memref<8x8xf32, #tpu.memory_space<vmem>>, %arg6: memref<8x8xf32, #tpu.memory_space<vmem>>, %arg7: memref<8x64xf32, #tpu.memory_space<vmem>>, %arg8: memref<1x64xf32, #tpu.memory_space<vmem>>, %arg9: memref<64x16xf32, #tpu.memory_space<vmem>>, %arg10: memref<16x128xf32, #tpu.memory_space<vmem>>, %arg11: memref<8x64xf32, #tpu.memory_space<vmem>>, %arg12: memref<1x1x8xf32, #tpu.memory_space<vmem>>) attributes {dimension_semantics = [#tpu.dimension_semantics<parallel>], iteration_bounds = array<i64: 1>, scalar_prefetch = 1 : i64, scratch_operands = 0 : i64, tpu.core_type = #tpu.core_type<tc>, window_params = [{transform_indices = @transform_0, window_bounds = array<i64: 8, 64>}, {transform_indices = @transform_1, window_bounds = array<i64: 8, 64>}, {transform_indices = @transform_2, window_bounds = array<i64: 8, 64>}, {transform_indices = @transform_3, window_bounds = array<i64: 8, 8>}, {transform_indices = @transform_4, window_bounds = array<i64: 8, 8>}, {pipeline_mode = #tpu.pipeline_mode<synchronous>, transform_indices = @transform_5, window_bounds = array<i64: 8, 64>}, {pipeline_mode = #tpu.pipeline_mode<synchronous>, transform_indices = @transform_6, window_bounds = array<i64: 1, 64>}, {pipeline_mode = #tpu.pipeline_mode<synchronous>, transform_indices = @transform_7, window_bounds = array<i64: 64, 16>}, {pipeline_mode = #tpu.pipeline_mode<synchronous>, transform_indices = @transform_8, window_bounds = array<i64: 16, 128>}, {pipeline_mode = #tpu.pipeline_mode<synchronous>, transform_indices = @transform_9, window_bounds = array<i64: 8, 64>}, {transform_indices = @transform_10, window_bounds = array<i64: 1, 1, 8>}]} {
    %c0 = arith.constant 0 : index
    %0 = memref.load %arg1[%c0] : memref<2xf32, #tpu.memory_space<smem>>
    %c1 = arith.constant 1 : index
    %1 = memref.load %arg1[%c1] : memref<2xf32, #tpu.memory_space<smem>>
    %c0_0 = arith.constant 0 : index
    %c0_1 = arith.constant 0 : index
    %2 = vector.load %arg2[%c0_0, %c0_1] : memref<8x64xf32, #tpu.memory_space<vmem>>, vector<8x64xf32>
    %3 = vector.extract_strided_slice %2 {offsets = [0, 0], sizes = [8, 8], strides = [1, 1]} : vector<8x64xf32> to vector<8x8xf32>
    %c0_2 = arith.constant 0 : index
    %c0_3 = arith.constant 0 : index
    %4 = vector.load %arg7[%c0_2, %c0_3] : memref<8x64xf32, #tpu.memory_space<vmem>>, vector<8x64xf32>
    %cst = arith.constant dense<0.000000e+00> : vector<8x64xf32>
    %5 = tpu.matmul %3, %4, %cst {dimension_numbers = #tpu.dot_dimension_numbers<[1], [0], [0], [1], [0, 0, 1, 1], [], []>} : vector<8x8xf32>, vector<8x64xf32>, vector<8x64xf32> -> vector<8x64xf32>
    %c0_4 = arith.constant 0 : index
    %c0_5 = arith.constant 0 : index
    %6 = vector.load %arg8[%c0_4, %c0_5] : memref<1x64xf32, #tpu.memory_space<vmem>>, vector<1x64xf32>
    %7 = vector.broadcast %6 : vector<1x64xf32> to vector<8x64xf32>
    %8 = arith.addf %5, %7 : vector<8x64xf32>
    %cst_6 = arith.constant 0.000000e+00 : f32
    %9 = vector.broadcast %cst_6 : f32 to vector<8x64xf32>
    %10 = arith.maximumf %8, %9 : vector<8x64xf32>
    %c0_7 = arith.constant 0 : index
    %c0_8 = arith.constant 0 : index
    %11 = vector.load %arg9[%c0_7, %c0_8] : memref<64x16xf32, #tpu.memory_space<vmem>>, vector<64x16xf32>
    %cst_9 = arith.constant dense<0.000000e+00> : vector<8x16xf32>
    %12 = tpu.matmul %10, %11, %cst_9 {dimension_numbers = #tpu.dot_dimension_numbers<[1], [0], [0], [1], [0, 0, 1, 1], [], []>} : vector<8x64xf32>, vector<64x16xf32>, vector<8x16xf32> -> vector<8x16xf32>
    %c0_10 = arith.constant 0 : index
    %c0_11 = arith.constant 0 : index
    %13 = vector.load %arg10[%c0_10, %c0_11] : memref<16x128xf32, #tpu.memory_space<vmem>>, vector<16x128xf32>
    %cst_12 = arith.constant dense<0.000000e+00> : vector<8x128xf32>
    %14 = tpu.matmul %12, %13, %cst_12 {dimension_numbers = #tpu.dot_dimension_numbers<[1], [0], [0], [1], [0, 0, 1, 1], [], []>} : vector<8x16xf32>, vector<16x128xf32>, vector<8x128xf32> -> vector<8x128xf32>
    %15 = vector.extract_strided_slice %14 {offsets = [0, 0], sizes = [8, 64], strides = [1, 1]} : vector<8x128xf32> to vector<8x64xf32>
    %16 = vector.extract_strided_slice %14 {offsets = [0, 64], sizes = [8, 64], strides = [1, 1]} : vector<8x128xf32> to vector<8x64xf32>
    %c0_13 = arith.constant 0 : index
    %c0_14 = arith.constant 0 : index
    %17 = vector.load %arg5[%c0_13, %c0_14] : memref<8x8xf32, #tpu.memory_space<vmem>>, vector<8x8xf32>
    %c0_15 = arith.constant 0 : index
    %c0_16 = arith.constant 0 : index
    %18 = vector.load %arg6[%c0_15, %c0_16] : memref<8x8xf32, #tpu.memory_space<vmem>>, vector<8x8xf32>
    %c0_17 = arith.constant 0 : index
    %c0_18 = arith.constant 0 : index
    %19 = vector.load %arg11[%c0_17, %c0_18] : memref<8x64xf32, #tpu.memory_space<vmem>>, vector<8x64xf32>
    %cst_19 = arith.constant dense<0.000000e+00> : vector<8x64xf32>
    %20 = tpu.matmul %17, %19, %cst_19 {dimension_numbers = #tpu.dot_dimension_numbers<[1], [0], [0], [1], [0, 0, 1, 1], [], []>} : vector<8x8xf32>, vector<8x64xf32>, vector<8x64xf32> -> vector<8x64xf32>
    %c0_20 = arith.constant 0 : index
    %c0_21 = arith.constant 0 : index
    %21 = vector.load %arg11[%c0_20, %c0_21] : memref<8x64xf32, #tpu.memory_space<vmem>>, vector<8x64xf32>
    %cst_22 = arith.constant dense<0.000000e+00> : vector<8x64xf32>
    %22 = tpu.matmul %18, %21, %cst_22 {dimension_numbers = #tpu.dot_dimension_numbers<[1], [0], [0], [1], [0, 0, 1, 1], [], []>} : vector<8x8xf32>, vector<8x64xf32>, vector<8x64xf32> -> vector<8x64xf32>
    %23 = arith.subf %20, %22 : vector<8x64xf32>
    %24 = arith.mulf %2, %15 : vector<8x64xf32>
    %25 = arith.mulf %23, %24 : vector<8x64xf32>
    %c0_23 = arith.constant 0 : index
    %c0_24 = arith.constant 0 : index
    %26 = vector.load %arg3[%c0_23, %c0_24] : memref<8x64xf32, #tpu.memory_space<vmem>>, vector<8x64xf32>
    %27 = arith.mulf %26, %16 : vector<8x64xf32>
    %28 = arith.mulf %20, %27 : vector<8x64xf32>
    %29 = arith.addf %25, %28 : vector<8x64xf32>
    %c0_25 = arith.constant 0 : index
    %c0_26 = arith.constant 0 : index
    %30 = vector.load %arg4[%c0_25, %c0_26] : memref<8x64xf32, #tpu.memory_space<vmem>>, vector<8x64xf32>
    %31 = arith.mulf %30, %16 : vector<8x64xf32>
    %32 = arith.mulf %22, %31 : vector<8x64xf32>
    %33 = arith.subf %29, %32 : vector<8x64xf32>
    %cst_27 = arith.constant 1.000000e+00 : f32
    %34 = vector.broadcast %cst_27 : f32 to vector<1x64xf32>
    %cst_28 = arith.constant dense<0.000000e+00> : vector<1x8xf32>
    %35 = tpu.matmul %34, %33, %cst_28 {dimension_numbers = #tpu.dot_dimension_numbers<[1], [1], [0], [0], [0, 0, 1, 0], [], []>} : vector<1x64xf32>, vector<8x64xf32>, vector<1x8xf32> -> vector<1x8xf32>
    %cst_29 = arith.constant dense<0.000000e+00> : vector<1x8xf32>
    %36 = tpu.matmul %34, %23, %cst_29 {dimension_numbers = #tpu.dot_dimension_numbers<[1], [1], [0], [0], [0, 0, 1, 0], [], []>} : vector<1x64xf32>, vector<8x64xf32>, vector<1x8xf32> -> vector<1x8xf32>
    %cst_30 = arith.constant 1.250000e-01 : f32
    %37 = arith.mulf %0, %cst_30 : f32
    %38 = vector.broadcast %37 : f32 to vector<1x8xf32>
    %39 = arith.mulf %38, %36 : vector<1x8xf32>
    %40 = arith.addf %35, %39 : vector<1x8xf32>
    %41 = vector.broadcast %1 : f32 to vector<1x8xf32>
    %42 = arith.mulf %41, %40 : vector<1x8xf32>
    %cst_31 = arith.constant 0.000000e+00 : f32
    %43 = vector.broadcast %cst_31 : f32 to vector<1x8xf32>
    %44 = arith.cmpf oge, %42, %43 : vector<1x8xf32>
    %cst_32 = arith.constant 0.000000e+00 : f32
    %45 = vector.broadcast %cst_32 : f32 to vector<1x8xf32>
    %46 = arith.subf %45, %42 : vector<1x8xf32>
    %47 = arith.select %44, %46, %42 : vector<1x8xi1>, vector<1x8xf32>
    %48 = math.exp %47 : vector<1x8xf32>
    %cst_33 = arith.constant 1.000000e+00 : f32
    %49 = vector.broadcast %cst_33 : f32 to vector<1x8xf32>
    %50 = arith.addf %49, %48 : vector<1x8xf32>
    %cst_34 = arith.constant 1.000000e+00 : f32
    %51 = vector.broadcast %cst_34 : f32 to vector<1x8xf32>
    %52 = arith.divf %51, %50 : vector<1x8xf32>
    %cst_35 = arith.constant 1.000000e+00 : f32
    %53 = vector.broadcast %cst_35 : f32 to vector<1x8xf32>
    %54 = arith.addf %53, %48 : vector<1x8xf32>
    %55 = arith.divf %48, %54 : vector<1x8xf32>
    %56 = arith.select %44, %52, %55 : vector<1x8xi1>, vector<1x8xf32>
    %57 = vector.shape_cast %56 : vector<1x8xf32> to vector<1x1x8xf32>
    %c0_36 = arith.constant 0 : index
    %c0_37 = arith.constant 0 : index
    %c0_38 = arith.constant 0 : index
    %58 = vector.load %arg12[%c0_36, %c0_37, %c0_38] : memref<1x1x8xf32, #tpu.memory_space<vmem>>, vector<1x1x8xf32>
    tpu.vector_store %arg12[%c0_36, %c0_37, %c0_38], %57 {strides = array<i32>} : memref<1x1x8xf32, #tpu.memory_space<vmem>>, vector<1x1x8xf32>,
    return
  }
  func.func @transform_0(%arg0: i32, %arg1: memref<2xf32, #tpu.memory_space<smem>>) -> (i32, i32) {
    %c0_i32 = arith.constant 0 : i32
    %c0_i32_0 = arith.constant 0 : i32
    return %arg0, %c0_i32 : i32, i32
  }
  func.func @transform_1(%arg0: i32, %arg1: memref<2xf32, #tpu.memory_space<smem>>) -> (i32, i32) {
    %c0_i32 = arith.constant 0 : i32
    %c0_i32_0 = arith.constant 0 : i32
    return %arg0, %c0_i32 : i32, i32
  }
  func.func @transform_2(%arg0: i32, %arg1: memref<2xf32, #tpu.memory_space<smem>>) -> (i32, i32) {
    %c0_i32 = arith.constant 0 : i32
    %c0_i32_0 = arith.constant 0 : i32
    return %arg0, %c0_i32 : i32, i32
  }
  func.func @transform_3(%arg0: i32, %arg1: memref<2xf32, #tpu.memory_space<smem>>) -> (i32, i32) {
    %c0_i32 = arith.constant 0 : i32
    %c0_i32_0 = arith.constant 0 : i32
    return %arg0, %c0_i32 : i32, i32
  }
  func.func @transform_4(%arg0: i32, %arg1: memref<2xf32, #tpu.memory_space<smem>>) -> (i32, i32) {
    %c0_i32 = arith.constant 0 : i32
    %c0_i32_0 = arith.constant 0 : i32
    return %arg0, %c0_i32 : i32, i32
  }
  func.func @transform_5(%arg0: i32, %arg1: memref<2xf32, #tpu.memory_space<smem>>) -> (i32, i32) {
    %c0_i32 = arith.constant 0 : i32
    %c0_i32_0 = arith.constant 0 : i32
    %c0_i32_1 = arith.constant 0 : i32
    return %c0_i32, %c0_i32_0 : i32, i32
  }
  func.func @transform_6(%arg0: i32, %arg1: memref<2xf32, #tpu.memory_space<smem>>) -> (i32, i32) {
    %c0_i32 = arith.constant 0 : i32
    %c0_i32_0 = arith.constant 0 : i32
    %c0_i32_1 = arith.constant 0 : i32
    return %c0_i32, %c0_i32_0 : i32, i32
  }
  func.func @transform_7(%arg0: i32, %arg1: memref<2xf32, #tpu.memory_space<smem>>) -> (i32, i32) {
    %c0_i32 = arith.constant 0 : i32
    %c0_i32_0 = arith.constant 0 : i32
    %c0_i32_1 = arith.constant 0 : i32
    return %c0_i32, %c0_i32_0 : i32, i32
  }
  func.func @transform_8(%arg0: i32, %arg1: memref<2xf32, #tpu.memory_space<smem>>) -> (i32, i32) {
    %c0_i32 = arith.constant 0 : i32
    %c0_i32_0 = arith.constant 0 : i32
    %c0_i32_1 = arith.constant 0 : i32
    return %c0_i32, %c0_i32_0 : i32, i32
  }
  func.func @transform_9(%arg0: i32, %arg1: memref<2xf32, #tpu.memory_space<smem>>) -> (i32, i32) {
    %c0_i32 = arith.constant 0 : i32
    %c0_i32_0 = arith.constant 0 : i32
    %c0_i32_1 = arith.constant 0 : i32
    return %c0_i32, %c0_i32_0 : i32, i32
  }
  func.func @transform_10(%arg0: i32, %arg1: memref<2xf32, #tpu.memory_space<smem>>) -> (i32, i32, i32) {
    %c0_i32 = arith.constant 0 : i32
    %c0_i32_0 = arith.constant 0 : i32
    %c0_i32_1 = arith.constant 0 : i32
    return %arg0, %c0_i32, %c0_i32_0 : i32, i32, i32
  }
}

</mosaic_0001>

<llo_original>
// kernel: tpu_custom_call.1
$region0: #{tpu_custom_call.1}
  #allocation0 [shape = 'u32[]', space=smem, size = 0x4, offset = 0x4, fixed_abs, tag = 'smem constant byte address 0x4 - core index']
  #allocation1 [shape = 'u32[72,128]{1,0:T(1,128)}', space=vmem, size = 0x9000, scoped, tag = 'internal scratch']
  #allocation2 [shape = 's32[1]{0}', space=sflag, size = 0x4, scoped, tag = 'scoped memory for tpu_custom_call.1']
  #allocation3 [shape = 'u8[512]{0}', space=smem, size = 0x200, scoped, tag = 'prefetched SMEM operand 0']
  %s0 = inlined_call_operand.vmem [shape: f32[2], index: 0, kind: input, shape index: {}]
  %s1 = inlined_call_operand.vmem [shape: f32[8,64], index: 1, kind: input, shape index: {}]
  %s2 = inlined_call_operand.vmem [shape: f32[8,64], index: 2, kind: input, shape index: {}]
  %s3 = inlined_call_operand.vmem [shape: f32[8,64], index: 3, kind: input, shape index: {}]
  %s4 = inlined_call_operand.vmem [shape: f32[8,8], index: 4, kind: input, shape index: {}]
  %s5 = inlined_call_operand.vmem [shape: f32[8,8], index: 5, kind: input, shape index: {}]
  %s6 = inlined_call_operand.vmem [shape: f32[8,64], index: 6, kind: input, shape index: {}]
  %s7 = inlined_call_operand.vmem [shape: f32[1,64], index: 7, kind: input, shape index: {}]
  %s8 = inlined_call_operand.vmem [shape: f32[64,16], index: 8, kind: input, shape index: {}]
  %s9 = inlined_call_operand.vmem [shape: f32[16,128], index: 9, kind: input, shape index: {}]
  %s10 = inlined_call_operand.vmem [shape: f32[8,64], index: 10, kind: input, shape index: {}]
  %s11 = inlined_call_operand.hbm [shape: f32[1,1,8], index: 11, kind: output, shape index: {}]
  %s12 = sld [smem:[#allocation0]]
  $region50: #{tpu_custom_call.1} parent=0
    _
  %s14 = ssub.s32 1, %s12
  %s15 = scalar_select 0, %s14, %s12
  %s17 = sshll.u32 %s0, 4
  %s18 = int_to_ptr.vmem [resolvable:$true] %s17
  %20 = dma.vmem_to_smem %s18, 16, [#allocation3], [#allocation2]
  %22 = dma.done [#allocation2], 16
  %23 = sfence
  $region1: #{tpu_custom_call.1} parent=0
    #allocation4 [shape = 'u8[512]{0}', space=vmem, size = 0x400, scoped, tag = 'output window, operand 0, single buffered']
    #allocation5 [shape = 's32[1]{0}', space=sflag, size = 0x4, scoped, tag = 'scoped memory for tpu_custom_call.1']
    %24 = vsyncpa [#allocation5], 0
    // Predicated region
    $region2: #{tpu_custom_call.1} parent=1 // pred_check
      _
    $region3: #{tpu_custom_call.1} parent=1 // pred_check_branch
      %26 = sbr.rel (0) target = $region5
    $region4: #{tpu_custom_call.1} parent=1 // pred_region
      _
    $region5: #{tpu_custom_call.1} parent=1 // pred_fallthru
      _
    // Predicated region
    $region6: #{tpu_custom_call.1} parent=1 // pred_check
      _
    $region7: #{tpu_custom_call.1} parent=1 // pred_check_branch
      %28 = sbr.rel (0) target = $region9
    $region8: #{tpu_custom_call.1} parent=1 // pred_region
      _
    $region9: #{tpu_custom_call.1} parent=1 // pred_fallthru
      _
    // Predicated region
    $region10: #{tpu_custom_call.1} parent=1 // pred_check
      _
    $region11: #{tpu_custom_call.1} parent=1 // pred_check_branch
      %30 = sbr.rel (0) target = $region13
    $region12: #{tpu_custom_call.1} parent=1 // pred_region
      _
    $region13: #{tpu_custom_call.1} parent=1 // pred_fallthru
      _
    // Predicated region
    $region14: #{tpu_custom_call.1} parent=1 // pred_check
      _
    $region15: #{tpu_custom_call.1} parent=1 // pred_check_branch
      %32 = sbr.rel (0) target = $region17
    $region16: #{tpu_custom_call.1} parent=1 // pred_region
      _
    $region17: #{tpu_custom_call.1} parent=1 // pred_fallthru
      _
    // Predicated region
    $region18: #{tpu_custom_call.1} parent=1 // pred_check
      _
    $region19: #{tpu_custom_call.1} parent=1 // pred_check_branch
      %34 = sbr.rel (0) target = $region21
    $region20: #{tpu_custom_call.1} parent=1 // pred_region
      _
    $region21: #{tpu_custom_call.1} parent=1 // pred_fallthru
      _
    // Predicated region
    $region22: #{tpu_custom_call.1} parent=1 // pred_check
      _
    $region23: #{tpu_custom_call.1} parent=1 // pred_check_branch
      %36 = sbr.rel (0) target = $region25
    $region24: #{tpu_custom_call.1} parent=1 // pred_region
      _
    $region25: #{tpu_custom_call.1} parent=1 // pred_fallthru
      _
    // Predicated region
    $region26: #{tpu_custom_call.1} parent=1 // pred_check
      _
    $region27: #{tpu_custom_call.1} parent=1 // pred_check_branch
      %38 = sbr.rel (0) target = $region29
    $region28: #{tpu_custom_call.1} parent=1 // pred_region
      _
    $region29: #{tpu_custom_call.1} parent=1 // pred_fallthru
      _
    // Predicated region
    $region30: #{tpu_custom_call.1} parent=1 // pred_check
      _
    $region31: #{tpu_custom_call.1} parent=1 // pred_check_branch
      %40 = sbr.rel (0) target = $region33
    $region32: #{tpu_custom_call.1} parent=1 // pred_region
      _
    $region33: #{tpu_custom_call.1} parent=1 // pred_fallthru
      _
    // Predicated region
    $region34: #{tpu_custom_call.1} parent=1 // pred_check
      _
    $region35: #{tpu_custom_call.1} parent=1 // pred_check_branch
      %42 = sbr.rel (0) target = $region37
    $region36: #{tpu_custom_call.1} parent=1 // pred_region
      _
    $region37: #{tpu_custom_call.1} parent=1 // pred_fallthru
      _
    // Predicated region
    $region38: #{tpu_custom_call.1} parent=1 // pred_check
      _
    $region39: #{tpu_custom_call.1} parent=1 // pred_check_branch
      %44 = sbr.rel (0) target = $region41
    $region40: #{tpu_custom_call.1} parent=1 // pred_region
      _
    $region41: #{tpu_custom_call.1} parent=1 // pred_fallthru
      _
    %s45 = sld [smem:[#allocation3]]
    %s46 = sld [smem:[#allocation3 + $0x1]]
    %v47 = vld [vmem:[%s1] sm:$0xff]
    %v48 = vld [vmem:[%s6] sm:$0xff]
    %v49 = vld [vmem:[%s7] sm:$0x1]
    %v51 = vperm.slane %v49, 0
    %vm53 = vcmask 64512
    %v55 = vsel %vm53, %v47, 0
    %57 = vmatpush.msra.mxu0 0.0
    %58 = vmatpush.msra.mxu0 0.0
    %59 = vmatpush.msra.mxu0 0.0
    %60 = vmatpush.msra.mxu0 0.0
    %61 = vmatpush.msra.mxu0 0.0
    %62 = vmatpush.msra.mxu0 0.0
    %63 = vmatpush.msra.mxu0 0.0
    %64 = vmatpush.msra.mxu0 0.0
    %65 = vmatpush.msra.mxu0 0.0
    %66 = vmatpush.msra.mxu0 0.0
    %67 = vmatpush.msra.mxu0 0.0
    %68 = vmatpush.msra.mxu0 0.0
    %69 = vmatpush.msra.mxu0 0.0
    %70 = vmatpush.msra.mxu0 0.0
    %71 = vmatpush.msra.mxu0 0.0
    %72 = vmatpush.msra.mxu0 %v48
    %73 = vmatmul.f32.gmra.mxu0 %v55
    %v74 = vpop.f32.mrf.mxu0
    %v75 = vadd.f32 %v51, %v74
    %76 = vdwg.mxu0
    %v77 = vmax.f32 %v75, 0.0
    %v78 = vld [vmem:[%s8] sm:$0xff]
    %v79 = vld [vmem:[%s8 + $0x8] sm:$0xff]
    %v80 = vld [vmem:[%s8 + $0x10] sm:$0xff]
    %v81 = vld [vmem:[%s8 + $0x18] sm:$0xff]
    %v82 = vld [vmem:[%s8 + $0x20] sm:$0xff]
    %v83 = vld [vmem:[%s8 + $0x28] sm:$0xff]
    %v84 = vld [vmem:[%s8 + $0x30] sm:$0xff]
    %v85 = vld [vmem:[%s8 + $0x38] sm:$0xff]
    %vm86 = vcmask 523264
    %v88 = vsel %vm86, %v77, 0
    %90 = vmatpush.msra.mxu0 0.0
    %91 = vmatpush.msra.mxu0 0.0
    %92 = vmatpush.msra.mxu0 0.0
    %93 = vmatpush.msra.mxu0 0.0
    %94 = vmatpush.msra.mxu0 0.0
    %95 = vmatpush.msra.mxu0 0.0
    %96 = vmatpush.msra.mxu0 0.0
    %97 = vmatpush.msra.mxu0 0.0
    %98 = vmatpush.msra.mxu0 %v85
    %99 = vmatpush.msra.mxu0 %v84
    %100 = vmatpush.msra.mxu0 %v83
    %101 = vmatpush.msra.mxu0 %v82
    %102 = vmatpush.msra.mxu0 %v81
    %103 = vmatpush.msra.mxu0 %v80
    %104 = vmatpush.msra.mxu0 %v79
    %105 = vmatpush.msra.mxu0 %v78
    %106 = vmatmul.f32.gmra.mxu0 %v88
    %v107 = vpop.f32.mrf.mxu0
    %v108 = vadd.f32 0.0, %v107
    %109 = vdwg.mxu0
    %v110 = vld [vmem:[%s9] sm:$0xff]
    %v111 = vld [vmem:[%s9 + $0x8] sm:$0xff]
    %vm112 = vcmask 130048
    %v114 = vsel %vm112, %v108, 0
    %116 = vmatpush.msra.mxu0 0.0
    %117 = vmatpush.msra.mxu0 0.0
    %118 = vmatpush.msra.mxu0 0.0
    %119 = vmatpush.msra.mxu0 0.0
    %120 = vmatpush.msra.mxu0 0.0
    %121 = vmatpush.msra.mxu0 0.0
    %122 = vmatpush.msra.mxu0 0.0
    %123 = vmatpush.msra.mxu0 0.0
    %124 = vmatpush.msra.mxu0 0.0
    %125 = vmatpush.msra.mxu0 0.0
    %126 = vmatpush.msra.mxu0 0.0
    %127 = vmatpush.msra.mxu0 0.0
    %128 = vmatpush.msra.mxu0 0.0
    %129 = vmatpush.msra.mxu0 0.0
    %130 = vmatpush.msra.mxu0 %v111
    %131 = vmatpush.msra.mxu0 %v110
    %132 = vmatmul.f32.gmra.mxu0 %v114
    %v133 = vpop.f32.mrf.mxu0
    %v134 = vadd.f32 0.0, %v133
    %135 = vdwg.mxu0
    %v136 = vld [vmem:[%s4] sm:$0xff]
    %v137 = vld [vmem:[%s5] sm:$0xff]
    %v138 = vld [vmem:[%s10] sm:$0xff]
    %v140 = vsel %vm53, %v136, 0
    %142 = vmatpush.msra.mxu0 0.0
    %143 = vmatpush.msra.mxu0 0.0
    %144 = vmatpush.msra.mxu0 0.0
    %145 = vmatpush.msra.mxu0 0.0
    %146 = vmatpush.msra.mxu0 0.0
    %147 = vmatpush.msra.mxu0 0.0
    %148 = vmatpush.msra.mxu0 0.0
    %149 = vmatpush.msra.mxu0 0.0
    %150 = vmatpush.msra.mxu0 0.0
    %151 = vmatpush.msra.mxu0 0.0
    %152 = vmatpush.msra.mxu0 0.0
    %153 = vmatpush.msra.mxu0 0.0
    %154 = vmatpush.msra.mxu0 0.0
    %155 = vmatpush.msra.mxu0 0.0
    %156 = vmatpush.msra.mxu0 0.0
    %157 = vmatpush.msra.mxu0 %v138
    %158 = vmatmul.f32.gmra.mxu0 %v140
    %v159 = vpop.f32.mrf.mxu0
    %v160 = vadd.f32 0.0, %v159
    %161 = vdwg.mxu0
    %v163 = vsel %vm53, %v137, 0
    %165 = vmatpush.msra.mxu0 0.0
    %166 = vmatpush.msra.mxu0 0.0
    %167 = vmatpush.msra.mxu0 0.0
    %168 = vmatpush.msra.mxu0 0.0
    %169 = vmatpush.msra.mxu0 0.0
    %170 = vmatpush.msra.mxu0 0.0
    %171 = vmatpush.msra.mxu0 0.0
    %172 = vmatpush.msra.mxu0 0.0
    %173 = vmatpush.msra.mxu0 0.0
    %174 = vmatpush.msra.mxu0 0.0
    %175 = vmatpush.msra.mxu0 0.0
    %176 = vmatpush.msra.mxu0 0.0
    %177 = vmatpush.msra.mxu0 0.0
    %178 = vmatpush.msra.mxu0 0.0
    %179 = vmatpush.msra.mxu0 0.0
    %180 = vmatpush.msra.mxu0 %v138
    %181 = vmatmul.f32.gmra.mxu0 %v163
    %v182 = vpop.f32.mrf.mxu0
    %v183 = vadd.f32 0.0, %v182
    %184 = vdwg.mxu0
    %v185 = vsub.f32 %v160, %v183
    %v186 = vmul.f32 %v47, %v134
    %v187 = vmul.f32 %v185, %v186
    %v188 = vld [vmem:[%s2] sm:$0xff]
    %190 = vrot.lane.b32.xlu0 %v134, 64
    %v191 = vpop.permute.xlu0 %190
    %v193 = vmul.f32 %v188, %v191
    %v194 = vmul.f32 %v160, %v193
    %v195 = vadd.f32 %v187, %v194
    %v196 = vld [vmem:[%s3] sm:$0xff]
    %v197 = vmul.f32 %v196, %v191
    %v198 = vmul.f32 %v183, %v197
    %v199 = vsub.f32 %v195, %v198
    %v201 = vsel %vm86, 1.0, 0
    %v204 = vsel %vm86, %v185, 0
    %206 = vmatpush.xpose.msra.mxu0 0.0
    %207 = vmatpush.xpose.msra.mxu0 0.0
    %208 = vmatpush.xpose.msra.mxu0 0.0
    %209 = vmatpush.xpose.msra.mxu0 0.0
    %210 = vmatpush.xpose.msra.mxu0 0.0
    %211 = vmatpush.xpose.msra.mxu0 0.0
    %212 = vmatpush.xpose.msra.mxu0 0.0
    %213 = vmatpush.xpose.msra.mxu0 0.0
    %214 = vmatpush.xpose.msra.mxu0 0.0
    %215 = vmatpush.xpose.msra.mxu0 0.0
    %216 = vmatpush.xpose.msra.mxu0 0.0
    %217 = vmatpush.xpose.msra.mxu0 0.0
    %218 = vmatpush.xpose.msra.mxu0 0.0
    %219 = vmatpush.xpose.msra.mxu0 0.0
    %220 = vmatpush.xpose.msra.mxu0 0.0
    %221 = vmatpush.xpose.msra.mxu0 %v204
    %222 = vmatmul.f32.gmra.mxu0 %v201
    %v223 = vpop.f32.mrf.mxu0
    %v224 = vadd.f32 0.0, %v223
    %225 = vdwg.mxu0
    %s226 = smul.f32 %s45, 0.125
    %v227 = vstv %s226
    %v228 = vmul.f32 %v227, %v224
    %v230 = vsel %vm86, %v199, 0
    %232 = vmatpush.xpose.msra.mxu0 0.0
    %233 = vmatpush.xpose.msra.mxu0 0.0
    %234 = vmatpush.xpose.msra.mxu0 0.0
    %235 = vmatpush.xpose.msra.mxu0 0.0
    %236 = vmatpush.xpose.msra.mxu0 0.0
    %237 = vmatpush.xpose.msra.mxu0 0.0
    %238 = vmatpush.xpose.msra.mxu0 0.0
    %239 = vmatpush.xpose.msra.mxu0 0.0
    %240 = vmatpush.xpose.msra.mxu0 0.0
    %241 = vmatpush.xpose.msra.mxu0 0.0
    %242 = vmatpush.xpose.msra.mxu0 0.0
    %243 = vmatpush.xpose.msra.mxu0 0.0
    %244 = vmatpush.xpose.msra.mxu0 0.0
    %245 = vmatpush.xpose.msra.mxu0 0.0
    %246 = vmatpush.xpose.msra.mxu0 0.0
    %247 = vmatpush.xpose.msra.mxu0 %v230
    %248 = vmatmul.f32.gmra.mxu0 %v201
    %v249 = vpop.f32.mrf.mxu0
    %v250 = vadd.f32 %v228, %v249
    %251 = vdwg.mxu0
    %v252 = vstv %s46
    %v253 = vmul.f32 %v252, %v250
    %vm254 = vcmp.ge.f32.partialorder %v253, 0.0
    %v255 = vsub.f32 0.0, %v253
    %v256 = vsel %vm254, %v255, %v253
    %v257 = vmul.f32 %v256, 1.442695
    %v258 = vpow.pop %v257
    %v259 = vadd.f32 %v258, 1.0
    %v260 = vrcp.pop %v259
    %v261 = vmul.f32 %v259, %v260
    %v262 = vsub.f32 1.0, %v261
    %v263 = vmul.f32 %v260, %v262
    %v264 = vadd.f32 %v260, %v263
    %vm265 = vweird.f32 %v259
    %vm266 = vweird.f32 %v260
    %vm267 = vmor %vm265, %vm266
    %v268 = vsel %vm267, %v260, %v264
    %v269 = vand.u32 2147483647, %v259
    %vm270 = vcmp.eq.f32.partialorder %v269, 8.507059e+37
    %v271 = vand.u32 %v259, 2147483648
    %v272 = vor.u32 1.1754944e-38, %v271
    %v273 = vsel %vm270, %v272, %v268
    %v274 = vmul.f32 1.0, %v273
    %v275 = vmul.f32 %v258, %v273
    %v276 = vsel %vm254, %v274, %v275
    %vm277 = vcmask 57344
    %278 = vst.msk [vmem:[#allocation4] sm:$0x1] %vm277, %v276
    // Predicated region
    $region42: #{tpu_custom_call.1} parent=1 // pred_check
      _
    $region43: #{tpu_custom_call.1} parent=1 // pred_check_branch
      %280 = sbr.rel (0) target = $region45
    $region44: #{tpu_custom_call.1} parent=1 // pred_region
      %282 = vsyncadd [#allocation5], 0
      %s284 = sshll.u32 [#allocation4], 4
      %s285 = int_to_ptr.vmem [resolvable:$true] %s284
      %s286 = sshll.u32 %s11, 4
      %s287 = int_to_ptr.hbm [resolvable:$true] %s286
      %289 = dma.vmem_to_hbm [thread:$0]  %s285, 16, %s287, [#allocation5]
    $region45: #{tpu_custom_call.1} parent=1 // pred_fallthru
      _
    // Predicated region
    $region46: #{tpu_custom_call.1} parent=1 // pred_check
      _
    $region47: #{tpu_custom_call.1} parent=1 // pred_check_branch
      %291 = sbr.rel (0) target = $region49
    $region48: #{tpu_custom_call.1} parent=1 // pred_region
      %293 = dma.done [#allocation5], 16
    $region49: #{tpu_custom_call.1} parent=1 // pred_fallthru
      _
    %294 = vsyncpa [#allocation5], 1

</llo_original>
